<compile_context>
chip_gen: v5e
topology: v5e:2x2
jax: 0.10.0
libtpu: 0.0.40
codegen_flags: <defaults>
</compile_context>

<pallas_src>
import functools
import math

import jax
import jax.numpy as jnp
from jax.experimental import pallas as pl
from jax.experimental.pallas import tpu as pltpu


_LANE = 128     # lane-dense output / out-proj slab width
_ROW_PAD = 8    # sublane rows reserved for the bias row inside each weight slab


# -----------------------------------------------------------------------------
# Fused MHA forward kernel (single invocation, everything VMEM resident).
# -----------------------------------------------------------------------------
def _mha_fused_kernel(x_ref, w_in_ref, w_o_ref, o_ref, *,
                      num_heads, head_dim, n_batch, l_q, s_kv):
    """Shapes (f32):
      x_ref:    (N*L + 2*N*S, E)   rows: [q (n-major) | k | v]
      w_in_ref: (3, E+8, E)        slab i: rows [:E] = W_i^T, row E = b_i
                                   (slab 0 pre-scaled by 1/sqrt(Dh))
      w_o_ref:  (E+8, 128)         rows [:E] = W_o^T (zero-padded lanes),
                                   row E = b_o (zero-padded lanes)
      o_ref:    (N*L, 128)         lane-dense store; cols [:E] are valid
    """
    H, Dh, N, L, S = num_heads, head_dim, n_batch, l_q, s_kv
    E = H * Dh
    nl, ns = N * L, N * S
    B = N * H

    # ---- row views of the pre-stacked input (sublane slices, offsets % 8 == 0)
    x_q = x_ref[0:nl, :]
    x_k = x_ref[nl:nl + ns, :]
    x_v = x_ref[nl + ns:nl + 2 * ns, :]

    # ---- lane-aligned projections; bias lives in row E of each slab ---------
    def proj(x, idx):
        w = w_in_ref[idx, 0:E, :]            # (E, E), lane offset 0
        b = w_in_ref[idx, E:E + 1, :]        # (1, E)
        return jnp.dot(x, w, preferred_element_type=jnp.float32) + b

    qp = proj(x_q, 0)                        # (N*L, E), already softmax-scaled
    kp = proj(x_k, 1)                        # (N*S, E)
    vp = proj(x_v, 2)                        # (N*S, E)

    # ---- head split: (N*T, E) -> (N*H, T, Dh) (Mosaic picks the relayout) ----
    def heads(x, T):
        x4 = x.reshape(N, T, H, Dh)
        return jnp.transpose(x4, (0, 2, 1, 3)).reshape(B, T, Dh)

    qh = heads(qp, L)                        # (B, L, Dh)
    kh = heads(kp, S)                        # (B, S, Dh)
    vh = heads(vp, S)                        # (B, S, Dh)

    # ---- attention scores: single-batch-dim einsum, contract minor dim ------
    s = jnp.einsum('bld,bsd->bls', qh, kh,
                   preferred_element_type=jnp.float32)       # (B, L, S)

    # ---- softmax on a dense 2-D layout ---------------------------------------
    s2 = s.reshape(B * L, S)
    m = jnp.max(s2, axis=-1, keepdims=True)
    p2 = jnp.exp(s2 - m)
    denom = jnp.sum(p2, axis=-1, keepdims=True)
    p2 = p2 * pl.reciprocal(denom, approx=True)
    p = p2.reshape(B, L, S)

    ctx = jnp.einsum('bls,bsd->bld', p, vh,
                     preferred_element_type=jnp.float32)     # (B, L, Dh)

    # ---- merge heads back to (N*L, E) ----------------------------------------
    ctx2d = jnp.transpose(ctx.reshape(N, H, L, Dh), (0, 2, 1, 3)).reshape(nl, E)

    # ---- output projection into a lane-dense 128-wide slab (bias in row E) ---
    out = jnp.dot(ctx2d, w_o_ref[0:E, :],
                  preferred_element_type=jnp.float32) + w_o_ref[E:E + 1, :]
    o_ref[...] = out.astype(o_ref.dtype)


@functools.partial(jax.jit, static_argnames=("num_heads",))
def _mha_forward(query, key, value, w_in_slab, w_o_slab, *, num_heads):
    """query: (L, N, E) seq-first; key/value: (S, N, E); returns (L, N, E)."""
    L, N, E = query.shape
    S = key.shape[0]
    head_dim = E // num_heads
    out_w = w_o_slab.shape[1]                 # 128 (lane-dense)

    # (T, N, E) -> (N*T, E) n-major rows, all three stacked into ONE input
    # array (one HBM->VMEM DMA instead of three; tiny XLA glue, fused under jit).
    q2d = jnp.transpose(query, (1, 0, 2)).reshape(N * L, E)
    k2d = jnp.transpose(key, (1, 0, 2)).reshape(N * S, E)
    v2d = jnp.transpose(value, (1, 0, 2)).reshape(N * S, E)
    x_all = jnp.concatenate([q2d, k2d, v2d], axis=0)

    kernel = functools.partial(
        _mha_fused_kernel, num_heads=num_heads, head_dim=head_dim,
        n_batch=N, l_q=L, s_kv=S)

    # Advisory cost estimate so XLA schedules the surrounding transposes freely.
    flops = (2 * N * L * E * E                 # q projection
             + 2 * 2 * N * S * E * E           # k, v projections
             + 2 * 2 * N * num_heads * L * S * head_dim   # qk^T and pv
             + 2 * N * L * E * out_w)          # out projection (padded)
    bytes_accessed = 4 * (x_all.size + w_in_slab.size + w_o_slab.size
                          + N * L * out_w)
    transcendentals = N * num_heads * L * S    # exp count

    out_pad = pl.pallas_call(
        kernel,
        out_shape=jax.ShapeDtypeStruct((N * L, out_w), query.dtype),
        in_specs=[pl.BlockSpec(memory_space=pltpu.MemorySpace.VMEM)] * 3,
        out_specs=pl.BlockSpec(memory_space=pltpu.MemorySpace.VMEM),
        cost_estimate=pl.CostEstimate(flops=flops,
                                      transcendentals=transcendentals,
                                      bytes_accessed=bytes_accessed),
    )(x_all, w_in_slab, w_o_slab)

    # (N*L, 128) -> (N*L, E) -> (L, N, E)
    out2d = out_pad[:, :E]
    return jnp.transpose(out2d.reshape(N, L, E), (1, 0, 2))


# -----------------------------------------------------------------------------
# MultiheadAttention module (parameters packed kernel-friendly at init).
# -----------------------------------------------------------------------------
class MultiheadAttentionPallas:
    def __init__(self, embed_dim, num_heads, key):
        assert embed_dim % num_heads == 0
        self.embed_dim = embed_dim
        self.num_heads = num_heads
        self.head_dim = embed_dim // num_heads
        k1, k2, k3, k4 = jax.random.split(key, 4)
        lim = 1.0 / math.sqrt(embed_dim)
        # deterministic synthetic parameters (same shapes as nn.MultiheadAttention)
        self.in_proj_w = jax.random.uniform(
            k1, (3 * embed_dim, embed_dim), jnp.float32, -lim, lim)
        self.in_proj_b = jax.random.uniform(
            k2, (3 * embed_dim,), jnp.float32, -lim, lim)
        self.out_proj_w = jax.random.uniform(
            k3, (embed_dim, embed_dim), jnp.float32, -lim, lim)
        self.out_proj_b = jax.random.uniform(
            k4, (embed_dim,), jnp.float32, -lim, lim)

        # Kernel-friendly packing (done once):
        #  * three lane-aligned (E, E) weight blocks in one (3, E+8, E) slab,
        #    each bias folded into row E of its block,
        #  * 1/sqrt(Dh) softmax scale folded into the q block,
        #  * out-proj slab zero-padded to 128 lanes (lane-dense kernel store)
        #    with its bias folded into row E.
        E = embed_dim
        scale = 1.0 / math.sqrt(self.head_dim)
        wq, wk, wv = (self.in_proj_w[:E], self.in_proj_w[E:2 * E],
                      self.in_proj_w[2 * E:])
        bq, bk, bv = (self.in_proj_b[:E], self.in_proj_b[E:2 * E],
                      self.in_proj_b[2 * E:])

        w_in = jnp.zeros((3, E + _ROW_PAD, E), jnp.float32)
        w_in = w_in.at[0, :E, :].set(wq.T * scale).at[0, E, :].set(bq * scale)
        w_in = w_in.at[1, :E, :].set(wk.T).at[1, E, :].set(bk)
        w_in = w_in.at[2, :E, :].set(wv.T).at[2, E, :].set(bv)
        self.w_in_slab = w_in

        w_o = jnp.zeros((E + _ROW_PAD, _LANE), jnp.float32)
        w_o = w_o.at[:E, :E].set(self.out_proj_w.T).at[E, :E].set(self.out_proj_b)
        self.w_o_slab = w_o

    def __call__(self, query, key, value, key_padding_mask=None,
                 attn_mask=None):
        # key_padding_mask / attn_mask are None in the reference forward call.
        out = _mha_forward(query, key, value, self.w_in_slab, self.w_o_slab,
                           num_heads=self.num_heads)
        # nn.MultiheadAttention returns (attn_output, attn_weights); the model
        # only uses [0], so attention weights are not materialized.
        return out, None


class Model:
    def __init__(self, embed_dim=32, num_heads=4, key=None):
        self.attn = MultiheadAttentionPallas(embed_dim, num_heads, key)

    def forward(self, query, key, value, key_padding_mask=None,
                attn_mask=None):
        v = self.attn(query, key, value, key_padding_mask, attn_mask)[0]
        return v


# -----------------------------------------------------------------------------
# Pure-JAX reference for the correctness check (uses the raw torch-style params).
# -----------------------------------------------------------------------------
def _ref_forward(model, query, key, value):
    m = model.attn
    L, N, E = query.shape
    S = key.shape[0]
    H, Dh = m.num_heads, m.head_dim
    wq, wk, wv = jnp.split(m.in_proj_w, 3, axis=0)
    bq, bk, bv = jnp.split(m.in_proj_b, 3)
    q = query @ wq.T + bq
    k = key @ wk.T + bk
    v = value @ wv.T + bv
    q = q.reshape(L, N, H, Dh).transpose(1, 2, 0, 3)
    k = k.reshape(S, N, H, Dh).transpose(1, 2, 0, 3)
    v = v.reshape(S, N, H, Dh).transpose(1, 2, 0, 3)
    s = jnp.einsum("nhld,nhsd->nhls", q, k) / jnp.sqrt(jnp.float32(Dh))
    p = jax.nn.softmax(s, axis=-1)
    ctx = jnp.einsum("nhls,nhsd->nhld", p, v)
    ctx = ctx.transpose(2, 0, 1, 3).reshape(L, N, E)
    return ctx @ m.out_proj_w.T + m.out_proj_b


if __name__ == "__main__":
    root = jax.random.PRNGKey(0)
    kp, kq, kk, kv = jax.random.split(root, 4)

    # TODO(synk): the original file's example tensors (query (1,2,3), key/value
    # (2,4,8)) are mutually inconsistent for MultiheadAttention; we use small
    # consistent shapes instead.
    L, S, N, E = 8, 8, 2, 32   # tgt seq, src seq, batch, embed dim (4 heads)
    model = Model(embed_dim=E, num_heads=4, key=kp)

    query = jax.random.normal(kq, (L, N, E), jnp.float32)
    key_t = jax.random.normal(kk, (S, N, E), jnp.float32)
    value = jax.random.normal(kv, (S, N, E), jnp.float32)

    out = model.forward(query, key_t, value)
    out = jax.block_until_ready(out)

    ref = _ref_forward(model, query, key_t, value)
    assert out.shape == (L, N, E)
    # tolerance accounts for pl.reciprocal(approx=True) (~2^-14 rel error)
    assert jnp.allclose(out, ref, atol=1e-3, rtol=1e-3), "mismatch vs reference"

    print("KERNEL_OK")
</pallas_src>

<mosaic_0001>
module attributes {stable_mosaic.version = 11 : i64} {
  func.func @_mha_fused_kernel(%arg0: memref<48x32xf32, #tpu.memory_space<vmem>>, %arg1: memref<3x40x32xf32, #tpu.memory_space<vmem>>, %arg2: memref<40x128xf32, #tpu.memory_space<vmem>>, %arg3: memref<16x128xf32, #tpu.memory_space<vmem>>) attributes {dimension_semantics = [], scalar_prefetch = 0 : i64, scratch_operands = 0 : i64, tpu.core_type = #tpu.core_type<tc>} {
    %c0 = arith.constant 0 : index
    %c0_0 = arith.constant 0 : index
    %0 = vector.load %arg0[%c0, %c0_0] : memref<48x32xf32, #tpu.memory_space<vmem>>, vector<16x32xf32>
    %c16 = arith.constant 16 : index
    %c0_1 = arith.constant 0 : index
    %1 = vector.load %arg0[%c16, %c0_1] : memref<48x32xf32, #tpu.memory_space<vmem>>, vector<16x32xf32>
    %c32 = arith.constant 32 : index
    %c0_2 = arith.constant 0 : index
    %2 = vector.load %arg0[%c32, %c0_2] : memref<48x32xf32, #tpu.memory_space<vmem>>, vector<16x32xf32>
    %c0_3 = arith.constant 0 : index
    %c0_4 = arith.constant 0 : index
    %c0_5 = arith.constant 0 : index
    %3 = vector.load %arg1[%c0_3, %c0_4, %c0_5] : memref<3x40x32xf32, #tpu.memory_space<vmem>>, vector<1x32x32xf32>
    %4 = vector.shape_cast %3 : vector<1x32x32xf32> to vector<32x32xf32>
    %c0_6 = arith.constant 0 : index
    %c32_7 = arith.constant 32 : index
    %c0_8 = arith.constant 0 : index
    %5 = vector.load %arg1[%c0_6, %c32_7, %c0_8] : memref<3x40x32xf32, #tpu.memory_space<vmem>>, vector<1x1x32xf32>
    %6 = vector.shape_cast %5 : vector<1x1x32xf32> to vector<1x32xf32>
    %cst = arith.constant dense<0.000000e+00> : vector<16x32xf32>
    %7 = tpu.matmul %0, %4, %cst {dimension_numbers = #tpu.dot_dimension_numbers<[1], [0], [0], [1], [0, 0, 1, 1], [], []>} : vector<16x32xf32>, vector<32x32xf32>, vector<16x32xf32> -> vector<16x32xf32>
    %8 = vector.broadcast %6 : vector<1x32xf32> to vector<16x32xf32>
    %9 = arith.addf %7, %8 : vector<16x32xf32>
    %c1 = arith.constant 1 : index
    %c0_9 = arith.constant 0 : index
    %c0_10 = arith.constant 0 : index
    %10 = vector.load %arg1[%c1, %c0_9, %c0_10] : memref<3x40x32xf32, #tpu.memory_space<vmem>>, vector<1x32x32xf32>
    %11 = vector.shape_cast %10 : vector<1x32x32xf32> to vector<32x32xf32>
    %c1_11 = arith.constant 1 : index
    %c32_12 = arith.constant 32 : index
    %c0_13 = arith.constant 0 : index
    %12 = vector.load %arg1[%c1_11, %c32_12, %c0_13] : memref<3x40x32xf32, #tpu.memory_space<vmem>>, vector<1x1x32xf32>
    %13 = vector.shape_cast %12 : vector<1x1x32xf32> to vector<1x32xf32>
    %cst_14 = arith.constant dense<0.000000e+00> : vector<16x32xf32>
    %14 = tpu.matmul %1, %11, %cst_14 {dimension_numbers = #tpu.dot_dimension_numbers<[1], [0], [0], [1], [0, 0, 1, 1], [], []>} : vector<16x32xf32>, vector<32x32xf32>, vector<16x32xf32> -> vector<16x32xf32>
    %15 = vector.broadcast %13 : vector<1x32xf32> to vector<16x32xf32>
    %16 = arith.addf %14, %15 : vector<16x32xf32>
    %c2 = arith.constant 2 : index
    %c0_15 = arith.constant 0 : index
    %c0_16 = arith.constant 0 : index
    %17 = vector.load %arg1[%c2, %c0_15, %c0_16] : memref<3x40x32xf32, #tpu.memory_space<vmem>>, vector<1x32x32xf32>
    %18 = vector.shape_cast %17 : vector<1x32x32xf32> to vector<32x32xf32>
    %c2_17 = arith.constant 2 : index
    %c32_18 = arith.constant 32 : index
    %c0_19 = arith.constant 0 : index
    %19 = vector.load %arg1[%c2_17, %c32_18, %c0_19] : memref<3x40x32xf32, #tpu.memory_space<vmem>>, vector<1x1x32xf32>
    %20 = vector.shape_cast %19 : vector<1x1x32xf32> to vector<1x32xf32>
    %cst_20 = arith.constant dense<0.000000e+00> : vector<16x32xf32>
    %21 = tpu.matmul %2, %18, %cst_20 {dimension_numbers = #tpu.dot_dimension_numbers<[1], [0], [0], [1], [0, 0, 1, 1], [], []>} : vector<16x32xf32>, vector<32x32xf32>, vector<16x32xf32> -> vector<16x32xf32>
    %22 = vector.broadcast %20 : vector<1x32xf32> to vector<16x32xf32>
    %23 = arith.addf %21, %22 : vector<16x32xf32>
    %24 = vector.shape_cast %9 : vector<16x32xf32> to vector<2x8x4x8xf32>
    %25 = tpu.transpose %24, [0, 2, 1, 3] : vector<2x8x4x8xf32> -> vector<2x4x8x8xf32>
    %26 = vector.shape_cast %25 : vector<2x4x8x8xf32> to vector<8x8x8xf32>
    %27 = vector.shape_cast %16 : vector<16x32xf32> to vector<2x8x4x8xf32>
    %28 = tpu.transpose %27, [0, 2, 1, 3] : vector<2x8x4x8xf32> -> vector<2x4x8x8xf32>
    %29 = vector.shape_cast %28 : vector<2x4x8x8xf32> to vector<8x8x8xf32>
    %30 = vector.shape_cast %23 : vector<16x32xf32> to vector<2x8x4x8xf32>
    %31 = tpu.transpose %30, [0, 2, 1, 3] : vector<2x8x4x8xf32> -> vector<2x4x8x8xf32>
    %32 = vector.shape_cast %31 : vector<2x4x8x8xf32> to vector<8x8x8xf32>
    "tpu.trace_start"() <{level = 10 : i32, message = "bld,bsd->bls"}> : () -> ()
    %cst_21 = arith.constant dense<0.000000e+00> : vector<8x8x8xf32>
    %33 = tpu.matmul %26, %29, %cst_21 {dimension_numbers = #tpu.dot_dimension_numbers<[2], [2], [1], [1], [0, 0, 0, 1, 1, 1], [0], [0]>} : vector<8x8x8xf32>, vector<8x8x8xf32>, vector<8x8x8xf32> -> vector<8x8x8xf32>
    "tpu.trace_stop"() : () -> ()
    %34 = vector.shape_cast %33 : vector<8x8x8xf32> to vector<64x8xf32>
    %cst_22 = arith.constant dense<0xFF800000> : vector<64xf32>
    %35 = vector.multi_reduction <maximumf>, %34, %cst_22 [1] : vector<64x8xf32> to vector<64xf32>
    %36 = vector.shape_cast %35 : vector<64xf32> to vector<64x1xf32>
    %37 = vector.broadcast %36 : vector<64x1xf32> to vector<64x8xf32>
    %38 = arith.subf %34, %37 : vector<64x8xf32>
    %39 = math.exp %38 : vector<64x8xf32>
    %cst_23 = arith.constant dense<0.000000e+00> : vector<64xf32>
    %40 = vector.multi_reduction <add>, %39, %cst_23 [1] : vector<64x8xf32> to vector<64xf32>
    %41 = vector.shape_cast %40 : vector<64xf32> to vector<64x1xf32>
    %42 = tpu.reciprocal %41 {approx = true} : vector<64x1xf32> -> vector<64x1xf32>
    %43 = vector.broadcast %42 : vector<64x1xf32> to vector<64x8xf32>
    %44 = arith.mulf %39, %43 : vector<64x8xf32>
    %45 = vector.shape_cast %44 : vector<64x8xf32> to vector<8x8x8xf32>
    "tpu.trace_start"() <{level = 10 : i32, message = "bls,bsd->bld"}> : () -> ()
    %cst_24 = arith.constant dense<0.000000e+00> : vector<8x8x8xf32>
    %46 = tpu.matmul %45, %32, %cst_24 {dimension_numbers = #tpu.dot_dimension_numbers<[2], [1], [1], [2], [0, 0, 0, 1, 1, 2], [0], [0]>} : vector<8x8x8xf32>, vector<8x8x8xf32>, vector<8x8x8xf32> -> vector<8x8x8xf32>
    "tpu.trace_stop"() : () -> ()
    %47 = vector.shape_cast %46 : vector<8x8x8xf32> to vector<2x4x8x8xf32>
    %48 = tpu.transpose %47, [0, 2, 1, 3] : vector<2x4x8x8xf32> -> vector<2x8x4x8xf32>
    %49 = vector.shape_cast %48 : vector<2x8x4x8xf32> to vector<16x32xf32>
    %c0_25 = arith.constant 0 : index
    %c0_26 = arith.constant 0 : index
    %50 = vector.load %arg2[%c0_25, %c0_26] : memref<40x128xf32, #tpu.memory_space<vmem>>, vector<32x128xf32>
    %cst_27 = arith.constant dense<0.000000e+00> : vector<16x128xf32>
    %51 = tpu.matmul %49, %50, %cst_27 {dimension_numbers = #tpu.dot_dimension_numbers<[1], [0], [0], [1], [0, 0, 1, 1], [], []>} : vector<16x32xf32>, vector<32x128xf32>, vector<16x128xf32> -> vector<16x128xf32>
    %c32_28 = arith.constant 32 : index
    %c0_29 = arith.constant 0 : index
    %52 = vector.load %arg2[%c32_28, %c0_29] : memref<40x128xf32, #tpu.memory_space<vmem>>, vector<1x128xf32>
    %53 = vector.broadcast %52 : vector<1x128xf32> to vector<16x128xf32>
    %54 = arith.addf %51, %53 : vector<16x128xf32>
    %c0_30 = arith.constant 0 : index
    %c0_31 = arith.constant 0 : index
    %55 = vector.load %arg3[%c0_30, %c0_31] : memref<16x128xf32, #tpu.memory_space<vmem>>, vector<16x128xf32>
    tpu.vector_store %arg3[%c0_30, %c0_31], %54 {strides = array<i32>} : memref<16x128xf32, #tpu.memory_space<vmem>>, vector<16x128xf32>,
    return
  }
}

</mosaic_0001>

<llo_original>
// kernel: _mha_forward.1
$region0: #{_mha_forward.1}
  #allocation0 [shape = 'u32[]', space=smem, size = 0x4, offset = 0x4, fixed_abs, tag = 'smem constant byte address 0x4 - core index']
  #allocation1 [shape = 'u32[72,128]{1,0:T(1,128)}', space=vmem, size = 0x9000, scoped, tag = 'internal scratch']
  %s0 = inlined_call_operand.vmem [shape: f32[48,32], index: 0, kind: input, shape index: {}]
  %s1 = inlined_call_operand.vmem [shape: f32[3,40,32], index: 1, kind: input, shape index: {}]
  %s2 = inlined_call_operand.vmem [shape: f32[40,128], index: 2, kind: input, shape index: {}]
  %s3 = inlined_call_operand.vmem [shape: f32[16,128], index: 3, kind: output, shape index: {}]
  %s4 = sld [smem:[#allocation0]]
  $region22: #{_mha_forward.1} parent=0
    _
  %s6 = ssub.s32 1, %s4
  %s7 = scalar_select 0, %s6, %s4
  // Predicated region
  $region2: #{_mha_forward.1} parent=0 // pred_check
    _
  $region3: #{_mha_forward.1} parent=0 // pred_check_branch
    %9 = sbr.rel (0) target = $region5
  $region4: #{_mha_forward.1} parent=0 // pred_region
    _
  $region5: #{_mha_forward.1} parent=0 // pred_fallthru
    _
  // Predicated region
  $region6: #{_mha_forward.1} parent=0 // pred_check
    _
  $region7: #{_mha_forward.1} parent=0 // pred_check_branch
    %11 = sbr.rel (0) target = $region9
  $region8: #{_mha_forward.1} parent=0 // pred_region
    _
  $region9: #{_mha_forward.1} parent=0 // pred_fallthru
    _
  // Predicated region
  $region10: #{_mha_forward.1} parent=0 // pred_check
    _
  $region11: #{_mha_forward.1} parent=0 // pred_check_branch
    %13 = sbr.rel (0) target = $region13
  $region12: #{_mha_forward.1} parent=0 // pred_region
    _
  $region13: #{_mha_forward.1} parent=0 // pred_fallthru
    _
  %v14 = vld [vmem:[%s0] sm:$0xff]
  %v15 = vld [vmem:[%s0 + $0x8] sm:$0xff]
  %v16 = vld [vmem:[%s0 + $0x10] sm:$0xff]
  %v17 = vld [vmem:[%s0 + $0x18] sm:$0xff]
  %v18 = vld [vmem:[%s0 + $0x20] sm:$0xff]
  %v19 = vld [vmem:[%s0 + $0x28] sm:$0xff]
  %v20 = vld [vmem:[%s1] sm:$0xff]
  %v21 = vld [vmem:[%s1 + $0x8] sm:$0xff]
  %v22 = vld [vmem:[%s1 + $0x10] sm:$0xff]
  %v23 = vld [vmem:[%s1 + $0x18] sm:$0xff]
  %v24 = vld [vmem:[%s1 + $0x20] sm:$0x1]
  %v25 = vperm.slane %v24, 0
  %vm26 = vcmask 261120
  %v28 = vsel %vm26, %v14, 0
  %v31 = vsel %vm26, %v15, 0
  %33 = vmatpush.msra.mxu0 0.0
  %34 = vmatpush.msra.mxu0 0.0
  %35 = vmatpush.msra.mxu0 0.0
  %36 = vmatpush.msra.mxu0 0.0
  %37 = vmatpush.msra.mxu0 0.0
  %38 = vmatpush.msra.mxu0 0.0
  %39 = vmatpush.msra.mxu0 0.0
  %40 = vmatpush.msra.mxu0 0.0
  %41 = vmatpush.msra.mxu0 0.0
  %42 = vmatpush.msra.mxu0 0.0
  %43 = vmatpush.msra.mxu0 0.0
  %44 = vmatpush.msra.mxu0 0.0
  %45 = vmatpush.msra.mxu0 %v23
  %46 = vmatpush.msra.mxu0 %v22
  %47 = vmatpush.msra.mxu0 %v21
  %48 = vmatpush.msra.mxu0 %v20
  %49 = vmatmul.f32.gmra.mxu0 %v28
  %v50 = vpop.f32.mrf.mxu0
  %v51 = vadd.f32 %v25, %v50
  %52 = vmatmul.f32.gmra.mxu0 %v31
  %v53 = vpop.f32.mrf.mxu0
  %v54 = vadd.f32 %v25, %v53
  %55 = vdwg.mxu0
  %s56 = scalar_lea.vmem %s1, 40
  %v57 = vld [vmem:[%s56] sm:$0xff]
  %v58 = vld [vmem:[%s56 + $0x8] sm:$0xff]
  %v59 = vld [vmem:[%s56 + $0x10] sm:$0xff]
  %v60 = vld [vmem:[%s56 + $0x18] sm:$0xff]
  %v61 = vld [vmem:[%s56 + $0x20] sm:$0x1]
  %v62 = vperm.slane %v61, 0
  %v64 = vsel %vm26, %v16, 0
  %v67 = vsel %vm26, %v17, 0
  %69 = vmatpush.msra.mxu0 0.0
  %70 = vmatpush.msra.mxu0 0.0
  %71 = vmatpush.msra.mxu0 0.0
  %72 = vmatpush.msra.mxu0 0.0
  %73 = vmatpush.msra.mxu0 0.0
  %74 = vmatpush.msra.mxu0 0.0
  %75 = vmatpush.msra.mxu0 0.0
  %76 = vmatpush.msra.mxu0 0.0
  %77 = vmatpush.msra.mxu0 0.0
  %78 = vmatpush.msra.mxu0 0.0
  %79 = vmatpush.msra.mxu0 0.0
  %80 = vmatpush.msra.mxu0 0.0
  %81 = vmatpush.msra.mxu0 %v60
  %82 = vmatpush.msra.mxu0 %v59
  %83 = vmatpush.msra.mxu0 %v58
  %84 = vmatpush.msra.mxu0 %v57
  %85 = vmatmul.f32.gmra.mxu0 %v64
  %v86 = vpop.f32.mrf.mxu0
  %v87 = vadd.f32 %v62, %v86
  %88 = vmatmul.f32.gmra.mxu0 %v67
  %v89 = vpop.f32.mrf.mxu0
  %v90 = vadd.f32 %v62, %v89
  %91 = vdwg.mxu0
  %s92 = scalar_lea.vmem %s1, 80
  %v93 = vld [vmem:[%s92] sm:$0xff]
  %v94 = vld [vmem:[%s92 + $0x8] sm:$0xff]
  %v95 = vld [vmem:[%s92 + $0x10] sm:$0xff]
  %v96 = vld [vmem:[%s92 + $0x18] sm:$0xff]
  %v97 = vld [vmem:[%s92 + $0x20] sm:$0x1]
  %v98 = vperm.slane %v97, 0
  %v100 = vsel %vm26, %v18, 0
  %v103 = vsel %vm26, %v19, 0
  %105 = vmatpush.msra.mxu0 0.0
  %106 = vmatpush.msra.mxu0 0.0
  %107 = vmatpush.msra.mxu0 0.0
  %108 = vmatpush.msra.mxu0 0.0
  %109 = vmatpush.msra.mxu0 0.0
  %110 = vmatpush.msra.mxu0 0.0
  %111 = vmatpush.msra.mxu0 0.0
  %112 = vmatpush.msra.mxu0 0.0
  %113 = vmatpush.msra.mxu0 0.0
  %114 = vmatpush.msra.mxu0 0.0
  %115 = vmatpush.msra.mxu0 0.0
  %116 = vmatpush.msra.mxu0 0.0
  %117 = vmatpush.msra.mxu0 %v96
  %118 = vmatpush.msra.mxu0 %v95
  %119 = vmatpush.msra.mxu0 %v94
  %120 = vmatpush.msra.mxu0 %v93
  %121 = vmatmul.f32.gmra.mxu0 %v100
  %v122 = vpop.f32.mrf.mxu0
  %v123 = vadd.f32 %v98, %v122
  %124 = vmatmul.f32.gmra.mxu0 %v103
  %v125 = vpop.f32.mrf.mxu0
  %v126 = vadd.f32 %v98, %v125
  %127 = vdwg.mxu0
  %130 = vrot.lane.b32.xlu0 %v51, 120
  %v131 = vpop.permute.xlu0 %130
  %132 = vrot.lane.b32.xlu0 %v54, 120
  %v133 = vpop.permute.xlu0 %132
  %136 = vrot.lane.b32.xlu0 %v51, 112
  %v137 = vpop.permute.xlu0 %136
  %138 = vrot.lane.b32.xlu0 %v54, 112
  %v139 = vpop.permute.xlu0 %138
  %142 = vrot.lane.b32.xlu0 %v51, 104
  %v143 = vpop.permute.xlu0 %142
  %144 = vrot.lane.b32.xlu0 %v54, 104
  %v145 = vpop.permute.xlu0 %144
  %v148 = vrot.slane %v137, 4
  %vm149 = vcmask 1047556
  %v150 = vsel %vm149, %v148, %v51
  %v151 = vrot.slane %v51, 4
  %v152 = vsel %vm149, %v137, %v151
  %v154 = vunpack.c.l.s4 1983009808
  %v155 = vunpack.c.0.s8 %v154
  %v156 = vperm.slane %v150, %v155
  %v158 = vunpack.c.l.s4 1983009808
  %v159 = vunpack.c.0.s8 %v158
  %v160 = vperm.slane %v152, %v159
  %v161 = vrot.slane %v143, 4
  %v162 = vsel %vm149, %v161, %v131
  %v163 = vrot.slane %v131, 4
  %v164 = vsel %vm149, %v143, %v163
  %v166 = vunpack.c.l.s4 1983009808
  %v167 = vunpack.c.0.s8 %v166
  %v168 = vperm.slane %v162, %v167
  %v170 = vunpack.c.l.s4 1983009808
  %v171 = vunpack.c.0.s8 %v170
  %v172 = vperm.slane %v164, %v171
  %v173 = vrot.slane %v168, 4
  %v174 = vsel %vm149, %v173, %v156
  %v175 = vrot.slane %v156, 4
  %v176 = vsel %vm149, %v168, %v175
  %v178 = vunpack.c.l.s4 1934713408
  %v179 = vunpack.c.0.s8 %v178
  %v180 = vperm.slane %v174, %v179
  %v182 = vunpack.c.l.s4 1934713408
  %v183 = vunpack.c.0.s8 %v182
  %v184 = vperm.slane %v176, %v183
  %v185 = vrot.slane %v172, 4
  %v186 = vsel %vm149, %v185, %v160
  %v187 = vrot.slane %v160, 4
  %v188 = vsel %vm149, %v172, %v187
  %v190 = vunpack.c.l.s4 1934713408
  %v191 = vunpack.c.0.s8 %v190
  %v192 = vperm.slane %v186, %v191
  %v194 = vunpack.c.l.s4 1934713408
  %v195 = vunpack.c.0.s8 %v194
  %v196 = vperm.slane %v188, %v195
  %v197 = vrot.slane %v180, 4
  %v198 = vsel %vm149, 0.0, %v197
  %v199 = vrot.slane %v184, 4
  %v200 = vsel %vm149, 0.0, %v199
  %v201 = vrot.slane %v192, 4
  %v202 = vsel %vm149, 0.0, %v201
  %v203 = vrot.slane %v196, 4
  %v204 = vsel %vm149, 0.0, %v203
  %v205 = vrot.slane %v139, 4
  %v206 = vsel %vm149, %v205, %v54
  %v207 = vrot.slane %v54, 4
  %v208 = vsel %vm149, %v139, %v207
  %v210 = vunpack.c.l.s4 1983009808
  %v211 = vunpack.c.0.s8 %v210
  %v212 = vperm.slane %v206, %v211
  %v214 = vunpack.c.l.s4 1983009808
  %v215 = vunpack.c.0.s8 %v214
  %v216 = vperm.slane %v208, %v215
  %v217 = vrot.slane %v145, 4
  %v218 = vsel %vm149, %v217, %v133
  %v219 = vrot.slane %v133, 4
  %v220 = vsel %vm149, %v145, %v219
  %v222 = vunpack.c.l.s4 1983009808
  %v223 = vunpack.c.0.s8 %v222
  %v224 = vperm.slane %v218, %v223
  %v226 = vunpack.c.l.s4 1983009808
  %v227 = vunpack.c.0.s8 %v226
  %v228 = vperm.slane %v220, %v227
  %v229 = vrot.slane %v224, 4
  %v230 = vsel %vm149, %v229, %v212
  %v231 = vrot.slane %v212, 4
  %v232 = vsel %vm149, %v224, %v231
  %v234 = vunpack.c.l.s4 1934713408
  %v235 = vunpack.c.0.s8 %v234
  %v236 = vperm.slane %v230, %v235
  %v238 = vunpack.c.l.s4 1934713408
  %v239 = vunpack.c.0.s8 %v238
  %v240 = vperm.slane %v232, %v239
  %v241 = vrot.slane %v228, 4
  %v242 = vsel %vm149, %v241, %v216
  %v243 = vrot.slane %v216, 4
  %v244 = vsel %vm149, %v228, %v243
  %v246 = vunpack.c.l.s4 1934713408
  %v247 = vunpack.c.0.s8 %v246
  %v248 = vperm.slane %v242, %v247
  %v250 = vunpack.c.l.s4 1934713408
  %v251 = vunpack.c.0.s8 %v250
  %v252 = vperm.slane %v244, %v251
  %v253 = vrot.slane %v236, 4
  %v254 = vsel %vm149, 0.0, %v253
  %v255 = vrot.slane %v240, 4
  %v256 = vsel %vm149, 0.0, %v255
  %v257 = vrot.slane %v248, 4
  %v258 = vsel %vm149, 0.0, %v257
  %v259 = vrot.slane %v252, 4
  %v260 = vsel %vm149, 0.0, %v259
  %v261 = vsel %vm149, %v199, %v180
  %v263 = vunpack.c.l.s4 1983009808
  %v264 = vunpack.c.0.s8 %v263
  %v265 = vperm.slane %v261, %v264
  %v266 = vrot.slane %v200, 4
  %v267 = vsel %vm149, %v266, %v198
  %v269 = vunpack.c.l.s4 1983009808
  %v270 = vunpack.c.0.s8 %v269
  %v271 = vperm.slane %v267, %v270
  %v272 = vsel %vm149, %v203, %v192
  %v274 = vunpack.c.l.s4 1983009808
  %v275 = vunpack.c.0.s8 %v274
  %v276 = vperm.slane %v272, %v275
  %v277 = vrot.slane %v204, 4
  %v278 = vsel %vm149, %v277, %v202
  %v280 = vunpack.c.l.s4 1983009808
  %v281 = vunpack.c.0.s8 %v280
  %v282 = vperm.slane %v278, %v281
  %v283 = vrot.slane %v271, 4
  %v284 = vsel %vm149, %v283, %v265
  %v285 = vrot.slane %v265, 4
  %v286 = vsel %vm149, %v271, %v285
  %v288 = vunpack.c.l.s4 1934713408
  %v289 = vunpack.c.0.s8 %v288
  %v290 = vperm.slane %v284, %v289
  %v292 = vunpack.c.l.s4 1934713408
  %v293 = vunpack.c.0.s8 %v292
  %v294 = vperm.slane %v286, %v293
  %v295 = vrot.slane %v282, 4
  %v296 = vsel %vm149, %v295, %v276
  %v297 = vrot.slane %v276, 4
  %v298 = vsel %vm149, %v282, %v297
  %v300 = vunpack.c.l.s4 1934713408
  %v301 = vunpack.c.0.s8 %v300
  %v302 = vperm.slane %v296, %v301
  %v304 = vunpack.c.l.s4 1934713408
  %v305 = vunpack.c.0.s8 %v304
  %v306 = vperm.slane %v298, %v305
  %v307 = vrot.slane %v302, 4
  %v308 = vsel %vm149, %v307, %v290
  %v309 = vrot.slane %v290, 4
  %v310 = vsel %vm149, %v302, %v309
  %v311 = vrot.slane %v306, 4
  %v312 = vsel %vm149, %v311, %v294
  %v313 = vrot.slane %v294, 4
  %v314 = vsel %vm149, %v306, %v313
  %v315 = vsel %vm149, %v255, %v236
  %v317 = vunpack.c.l.s4 1983009808
  %v318 = vunpack.c.0.s8 %v317
  %v319 = vperm.slane %v315, %v318
  %v320 = vrot.slane %v256, 4
  %v321 = vsel %vm149, %v320, %v254
  %v323 = vunpack.c.l.s4 1983009808
  %v324 = vunpack.c.0.s8 %v323
  %v325 = vperm.slane %v321, %v324
  %v326 = vsel %vm149, %v259, %v248
  %v328 = vunpack.c.l.s4 1983009808
  %v329 = vunpack.c.0.s8 %v328
  %v330 = vperm.slane %v326, %v329
  %v331 = vrot.slane %v260, 4
  %v332 = vsel %vm149, %v331, %v258
  %v334 = vunpack.c.l.s4 1983009808
  %v335 = vunpack.c.0.s8 %v334
  %v336 = vperm.slane %v332, %v335
  %v337 = vrot.slane %v325, 4
  %v338 = vsel %vm149, %v337, %v319
  %v339 = vrot.slane %v319, 4
  %v340 = vsel %vm149, %v325, %v339
  %v342 = vunpack.c.l.s4 1934713408
  %v343 = vunpack.c.0.s8 %v342
  %v344 = vperm.slane %v338, %v343
  %v346 = vunpack.c.l.s4 1934713408
  %v347 = vunpack.c.0.s8 %v346
  %v348 = vperm.slane %v340, %v347
  %v349 = vrot.slane %v336, 4
  %v350 = vsel %vm149, %v349, %v330
  %v351 = vrot.slane %v330, 4
  %v352 = vsel %vm149, %v336, %v351
  %v354 = vunpack.c.l.s4 1934713408
  %v355 = vunpack.c.0.s8 %v354
  %v356 = vperm.slane %v350, %v355
  %v358 = vunpack.c.l.s4 1934713408
  %v359 = vunpack.c.0.s8 %v358
  %v360 = vperm.slane %v352, %v359
  %v361 = vrot.slane %v356, 4
  %v362 = vsel %vm149, %v361, %v344
  %v363 = vrot.slane %v344, 4
  %v364 = vsel %vm149, %v356, %v363
  %v365 = vrot.slane %v360, 4
  %v366 = vsel %vm149, %v365, %v348
  %v367 = vrot.slane %v348, 4
  %v368 = vsel %vm149, %v360, %v367
  %371 = vrot.lane.b32.xlu0 %v87, 120
  %v372 = vpop.permute.xlu0 %371
  %373 = vrot.lane.b32.xlu0 %v90, 120
  %v374 = vpop.permute.xlu0 %373
  %377 = vrot.lane.b32.xlu0 %v87, 112
  %v378 = vpop.permute.xlu0 %377
  %379 = vrot.lane.b32.xlu0 %v90, 112
  %v380 = vpop.permute.xlu0 %379
  %383 = vrot.lane.b32.xlu0 %v87, 104
  %v384 = vpop.permute.xlu0 %383
  %385 = vrot.lane.b32.xlu0 %v90, 104
  %v386 = vpop.permute.xlu0 %385
  %v389 = vrot.slane %v378, 4
  %v390 = vsel %vm149, %v389, %v87
  %v391 = vrot.slane %v87, 4
  %v392 = vsel %vm149, %v378, %v391
  %v394 = vunpack.c.l.s4 1983009808
  %v395 = vunpack.c.0.s8 %v394
  %v396 = vperm.slane %v390, %v395
  %v398 = vunpack.c.l.s4 1983009808
  %v399 = vunpack.c.0.s8 %v398
  %v400 = vperm.slane %v392, %v399
  %v401 = vrot.slane %v384, 4
  %v402 = vsel %vm149, %v401, %v372
  %v403 = vrot.slane %v372, 4
  %v404 = vsel %vm149, %v384, %v403
  %v406 = vunpack.c.l.s4 1983009808
  %v407 = vunpack.c.0.s8 %v406
  %v408 = vperm.slane %v402, %v407
  %v410 = vunpack.c.l.s4 1983009808
  %v411 = vunpack.c.0.s8 %v410
  %v412 = vperm.slane %v404, %v411
  %v413 = vrot.slane %v408, 4
  %v414 = vsel %vm149, %v413, %v396
  %v415 = vrot.slane %v396, 4
  %v416 = vsel %vm149, %v408, %v415
  %v418 = vunpack.c.l.s4 1934713408
  %v419 = vunpack.c.0.s8 %v418
  %v420 = vperm.slane %v414, %v419
  %v422 = vunpack.c.l.s4 1934713408
  %v423 = vunpack.c.0.s8 %v422
  %v424 = vperm.slane %v416, %v423
  %v425 = vrot.slane %v412, 4
  %v426 = vsel %vm149, %v425, %v400
  %v427 = vrot.slane %v400, 4
  %v428 = vsel %vm149, %v412, %v427
  %v430 = vunpack.c.l.s4 1934713408
  %v431 = vunpack.c.0.s8 %v430
  %v432 = vperm.slane %v426, %v431
  %v434 = vunpack.c.l.s4 1934713408
  %v435 = vunpack.c.0.s8 %v434
  %v436 = vperm.slane %v428, %v435
  %v437 = vrot.slane %v420, 4
  %v438 = vsel %vm149, 0.0, %v437
  %v439 = vrot.slane %v424, 4
  %v440 = vsel %vm149, 0.0, %v439
  %v441 = vrot.slane %v432, 4
  %v442 = vsel %vm149, 0.0, %v441
  %v443 = vrot.slane %v436, 4
  %v444 = vsel %vm149, 0.0, %v443
  %v445 = vrot.slane %v380, 4
  %v446 = vsel %vm149, %v445, %v90
  %v447 = vrot.slane %v90, 4
  %v448 = vsel %vm149, %v380, %v447
  %v450 = vunpack.c.l.s4 1983009808
  %v451 = vunpack.c.0.s8 %v450
  %v452 = vperm.slane %v446, %v451
  %v454 = vunpack.c.l.s4 1983009808
  %v455 = vunpack.c.0.s8 %v454
  %v456 = vperm.slane %v448, %v455
  %v457 = vrot.slane %v386, 4
  %v458 = vsel %vm149, %v457, %v374
  %v459 = vrot.slane %v374, 4
  %v460 = vsel %vm149, %v386, %v459
  %v462 = vunpack.c.l.s4 1983009808
  %v463 = vunpack.c.0.s8 %v462
  %v464 = vperm.slane %v458, %v463
  %v466 = vunpack.c.l.s4 1983009808
  %v467 = vunpack.c.0.s8 %v466
  %v468 = vperm.slane %v460, %v467
  %v469 = vrot.slane %v464, 4
  %v470 = vsel %vm149, %v469, %v452
  %v471 = vrot.slane %v452, 4
  %v472 = vsel %vm149, %v464, %v471
  %v474 = vunpack.c.l.s4 1934713408
  %v475 = vunpack.c.0.s8 %v474
  %v476 = vperm.slane %v470, %v475
  %v478 = vunpack.c.l.s4 1934713408
  %v479 = vunpack.c.0.s8 %v478
  %v480 = vperm.slane %v472, %v479
  %v481 = vrot.slane %v468, 4
  %v482 = vsel %vm149, %v481, %v456
  %v483 = vrot.slane %v456, 4
  %v484 = vsel %vm149, %v468, %v483
  %v486 = vunpack.c.l.s4 1934713408
  %v487 = vunpack.c.0.s8 %v486
  %v488 = vperm.slane %v482, %v487
  %v490 = vunpack.c.l.s4 1934713408
  %v491 = vunpack.c.0.s8 %v490
  %v492 = vperm.slane %v484, %v491
  %v493 = vrot.slane %v476, 4
  %v494 = vsel %vm149, 0.0, %v493
  %v495 = vrot.slane %v480, 4
  %v496 = vsel %vm149, 0.0, %v495
  %v497 = vrot.slane %v488, 4
  %v498 = vsel %vm149, 0.0, %v497
  %v499 = vrot.slane %v492, 4
  %v500 = vsel %vm149, 0.0, %v499
  %v501 = vsel %vm149, %v439, %v420
  %v503 = vunpack.c.l.s4 1983009808
  %v504 = vunpack.c.0.s8 %v503
  %v505 = vperm.slane %v501, %v504
  %v506 = vrot.slane %v440, 4
  %v507 = vsel %vm149, %v506, %v438
  %v509 = vunpack.c.l.s4 1983009808
  %v510 = vunpack.c.0.s8 %v509
  %v511 = vperm.slane %v507, %v510
  %v512 = vsel %vm149, %v443, %v432
  %v514 = vunpack.c.l.s4 1983009808
  %v515 = vunpack.c.0.s8 %v514
  %v516 = vperm.slane %v512, %v515
  %v517 = vrot.slane %v444, 4
  %v518 = vsel %vm149, %v517, %v442
  %v520 = vunpack.c.l.s4 1983009808
  %v521 = vunpack.c.0.s8 %v520
  %v522 = vperm.slane %v518, %v521
  %v523 = vrot.slane %v511, 4
  %v524 = vsel %vm149, %v523, %v505
  %v525 = vrot.slane %v505, 4
  %v526 = vsel %vm149, %v511, %v525
  %v528 = vunpack.c.l.s4 1934713408
  %v529 = vunpack.c.0.s8 %v528
  %v530 = vperm.slane %v524, %v529
  %v532 = vunpack.c.l.s4 1934713408
  %v533 = vunpack.c.0.s8 %v532
  %v534 = vperm.slane %v526, %v533
  %v535 = vrot.slane %v522, 4
  %v536 = vsel %vm149, %v535, %v516
  %v537 = vrot.slane %v516, 4
  %v538 = vsel %vm149, %v522, %v537
  %v540 = vunpack.c.l.s4 1934713408
  %v541 = vunpack.c.0.s8 %v540
  %v542 = vperm.slane %v536, %v541
  %v544 = vunpack.c.l.s4 1934713408
  %v545 = vunpack.c.0.s8 %v544
  %v546 = vperm.slane %v538, %v545
  %v547 = vrot.slane %v542, 4
  %v548 = vsel %vm149, %v547, %v530
  %v549 = vrot.slane %v530, 4
  %v550 = vsel %vm149, %v542, %v549
  %v551 = vrot.slane %v546, 4
  %v552 = vsel %vm149, %v551, %v534
  %v553 = vrot.slane %v534, 4
  %v554 = vsel %vm149, %v546, %v553
  %v555 = vsel %vm149, %v495, %v476
  %v557 = vunpack.c.l.s4 1983009808
  %v558 = vunpack.c.0.s8 %v557
  %v559 = vperm.slane %v555, %v558
  %v560 = vrot.slane %v496, 4
  %v561 = vsel %vm149, %v560, %v494
  %v563 = vunpack.c.l.s4 1983009808
  %v564 = vunpack.c.0.s8 %v563
  %v565 = vperm.slane %v561, %v564
  %v566 = vsel %vm149, %v499, %v488
  %v568 = vunpack.c.l.s4 1983009808
  %v569 = vunpack.c.0.s8 %v568
  %v570 = vperm.slane %v566, %v569
  %v571 = vrot.slane %v500, 4
  %v572 = vsel %vm149, %v571, %v498
  %v574 = vunpack.c.l.s4 1983009808
  %v575 = vunpack.c.0.s8 %v574
  %v576 = vperm.slane %v572, %v575
  %v577 = vrot.slane %v565, 4
  %v578 = vsel %vm149, %v577, %v559
  %v579 = vrot.slane %v559, 4
  %v580 = vsel %vm149, %v565, %v579
  %v582 = vunpack.c.l.s4 1934713408
  %v583 = vunpack.c.0.s8 %v582
  %v584 = vperm.slane %v578, %v583
  %v586 = vunpack.c.l.s4 1934713408
  %v587 = vunpack.c.0.s8 %v586
  %v588 = vperm.slane %v580, %v587
  %v589 = vrot.slane %v576, 4
  %v590 = vsel %vm149, %v589, %v570
  %v591 = vrot.slane %v570, 4
  %v592 = vsel %vm149, %v576, %v591
  %v594 = vunpack.c.l.s4 1934713408
  %v595 = vunpack.c.0.s8 %v594
  %v596 = vperm.slane %v590, %v595
  %v598 = vunpack.c.l.s4 1934713408
  %v599 = vunpack.c.0.s8 %v598
  %v600 = vperm.slane %v592, %v599
  %v601 = vrot.slane %v596, 4
  %v602 = vsel %vm149, %v601, %v584
  %v603 = vrot.slane %v584, 4
  %v604 = vsel %vm149, %v596, %v603
  %v605 = vrot.slane %v600, 4
  %v606 = vsel %vm149, %v605, %v588
  %v607 = vrot.slane %v588, 4
  %v608 = vsel %vm149, %v600, %v607
  %611 = vrot.lane.b32.xlu0 %v123, 120
  %v612 = vpop.permute.xlu0 %611
  %613 = vrot.lane.b32.xlu0 %v126, 120
  %v614 = vpop.permute.xlu0 %613
  %617 = vrot.lane.b32.xlu0 %v123, 112
  %v618 = vpop.permute.xlu0 %617
  %619 = vrot.lane.b32.xlu0 %v126, 112
  %v620 = vpop.permute.xlu0 %619
  %623 = vrot.lane.b32.xlu0 %v123, 104
  %v624 = vpop.permute.xlu0 %623
  %625 = vrot.lane.b32.xlu0 %v126, 104
  %v626 = vpop.permute.xlu0 %625
  %v629 = vrot.slane %v618, 4
  %v630 = vsel %vm149, %v629, %v123
  %v631 = vrot.slane %v123, 4
  %v632 = vsel %vm149, %v618, %v631
  %v634 = vunpack.c.l.s4 1983009808
  %v635 = vunpack.c.0.s8 %v634
  %v636 = vperm.slane %v630, %v635
  %v638 = vunpack.c.l.s4 1983009808
  %v639 = vunpack.c.0.s8 %v638
  %v640 = vperm.slane %v632, %v639
  %v641 = vrot.slane %v624, 4
  %v642 = vsel %vm149, %v641, %v612
  %v643 = vrot.slane %v612, 4
  %v644 = vsel %vm149, %v624, %v643
  %v646 = vunpack.c.l.s4 1983009808
  %v647 = vunpack.c.0.s8 %v646
  %v648 = vperm.slane %v642, %v647
  %v650 = vunpack.c.l.s4 1983009808
  %v651 = vunpack.c.0.s8 %v650
  %v652 = vperm.slane %v644, %v651
  %v653 = vrot.slane %v648, 4
  %v654 = vsel %vm149, %v653, %v636
  %v655 = vrot.slane %v636, 4
  %v656 = vsel %vm149, %v648, %v655
  %v658 = vunpack.c.l.s4 1934713408
  %v659 = vunpack.c.0.s8 %v658
  %v660 = vperm.slane %v654, %v659
  %v662 = vunpack.c.l.s4 1934713408
  %v663 = vunpack.c.0.s8 %v662
  %v664 = vperm.slane %v656, %v663
  %v665 = vrot.slane %v652, 4
  %v666 = vsel %vm149, %v665, %v640
  %v667 = vrot.slane %v640, 4
  %v668 = vsel %vm149, %v652, %v667
  %v670 = vunpack.c.l.s4 1934713408
  %v671 = vunpack.c.0.s8 %v670
  %v672 = vperm.slane %v666, %v671
  %v674 = vunpack.c.l.s4 1934713408
  %v675 = vunpack.c.0.s8 %v674
  %v676 = vperm.slane %v668, %v675
  %v677 = vrot.slane %v660, 4
  %v678 = vsel %vm149, 0.0, %v677
  %v679 = vrot.slane %v664, 4
  %v680 = vsel %vm149, 0.0, %v679
  %v681 = vrot.slane %v672, 4
  %v682 = vsel %vm149, 0.0, %v681
  %v683 = vrot.slane %v676, 4
  %v684 = vsel %vm149, 0.0, %v683
  %v685 = vrot.slane %v620, 4
  %v686 = vsel %vm149, %v685, %v126
  %v687 = vrot.slane %v126, 4
  %v688 = vsel %vm149, %v620, %v687
  %v690 = vunpack.c.l.s4 1983009808
  %v691 = vunpack.c.0.s8 %v690
  %v692 = vperm.slane %v686, %v691
  %v694 = vunpack.c.l.s4 1983009808
  %v695 = vunpack.c.0.s8 %v694
  %v696 = vperm.slane %v688, %v695
  %v697 = vrot.slane %v626, 4
  %v698 = vsel %vm149, %v697, %v614
  %v699 = vrot.slane %v614, 4
  %v700 = vsel %vm149, %v626, %v699
  %v702 = vunpack.c.l.s4 1983009808
  %v703 = vunpack.c.0.s8 %v702
  %v704 = vperm.slane %v698, %v703
  %v706 = vunpack.c.l.s4 1983009808
  %v707 = vunpack.c.0.s8 %v706
  %v708 = vperm.slane %v700, %v707
  %v709 = vrot.slane %v704, 4
  %v710 = vsel %vm149, %v709, %v692
  %v711 = vrot.slane %v692, 4
  %v712 = vsel %vm149, %v704, %v711
  %v714 = vunpack.c.l.s4 1934713408
  %v715 = vunpack.c.0.s8 %v714
  %v716 = vperm.slane %v710, %v715
  %v718 = vunpack.c.l.s4 1934713408
  %v719 = vunpack.c.0.s8 %v718
  %v720 = vperm.slane %v712, %v719
  %v721 = vrot.slane %v708, 4
  %v722 = vsel %vm149, %v721, %v696
  %v723 = vrot.slane %v696, 4
  %v724 = vsel %vm149, %v708, %v723
  %v726 = vunpack.c.l.s4 1934713408
  %v727 = vunpack.c.0.s8 %v726
  %v728 = vperm.slane %v722, %v727
  %v730 = vunpack.c.l.s4 1934713408
  %v731 = vunpack.c.0.s8 %v730
  %v732 = vperm.slane %v724, %v731
  %v733 = vrot.slane %v716, 4
  %v734 = vsel %vm149, 0.0, %v733
  %v735 = vrot.slane %v720, 4
  %v736 = vsel %vm149, 0.0, %v735
  %v737 = vrot.slane %v728, 4
  %v738 = vsel %vm149, 0.0, %v737
  %v739 = vrot.slane %v732, 4
  %v740 = vsel %vm149, 0.0, %v739
  %v741 = vsel %vm149, %v679, %v660
  %v743 = vunpack.c.l.s4 1983009808
  %v744 = vunpack.c.0.s8 %v743
  %v745 = vperm.slane %v741, %v744
  %v746 = vrot.slane %v680, 4
  %v747 = vsel %vm149, %v746, %v678
  %v749 = vunpack.c.l.s4 1983009808
  %v750 = vunpack.c.0.s8 %v749
  %v751 = vperm.slane %v747, %v750
  %v752 = vsel %vm149, %v683, %v672
  %v754 = vunpack.c.l.s4 1983009808
  %v755 = vunpack.c.0.s8 %v754
  %v756 = vperm.slane %v752, %v755
  %v757 = vrot.slane %v684, 4
  %v758 = vsel %vm149, %v757, %v682
  %v760 = vunpack.c.l.s4 1983009808
  %v761 = vunpack.c.0.s8 %v760
  %v762 = vperm.slane %v758, %v761
  %v763 = vrot.slane %v751, 4
  %v764 = vsel %vm149, %v763, %v745
  %v765 = vrot.slane %v745, 4
  %v766 = vsel %vm149, %v751, %v765
  %v768 = vunpack.c.l.s4 1934713408
  %v769 = vunpack.c.0.s8 %v768
  %v770 = vperm.slane %v764, %v769
  %v772 = vunpack.c.l.s4 1934713408
  %v773 = vunpack.c.0.s8 %v772
  %v774 = vperm.slane %v766, %v773
  %v775 = vrot.slane %v762, 4
  %v776 = vsel %vm149, %v775, %v756
  %v777 = vrot.slane %v756, 4
  %v778 = vsel %vm149, %v762, %v777
  %v780 = vunpack.c.l.s4 1934713408
  %v781 = vunpack.c.0.s8 %v780
  %v782 = vperm.slane %v776, %v781
  %v784 = vunpack.c.l.s4 1934713408
  %v785 = vunpack.c.0.s8 %v784
  %v786 = vperm.slane %v778, %v785
  %v787 = vrot.slane %v782, 4
  %v788 = vsel %vm149, %v787, %v770
  %v789 = vrot.slane %v770, 4
  %v790 = vsel %vm149, %v782, %v789
  %v791 = vrot.slane %v786, 4
  %v792 = vsel %vm149, %v791, %v774
  %v793 = vrot.slane %v774, 4
  %v794 = vsel %vm149, %v786, %v793
  %v795 = vsel %vm149, %v735, %v716
  %v797 = vunpack.c.l.s4 1983009808
  %v798 = vunpack.c.0.s8 %v797
  %v799 = vperm.slane %v795, %v798
  %v800 = vrot.slane %v736, 4
  %v801 = vsel %vm149, %v800, %v734
  %v803 = vunpack.c.l.s4 1983009808
  %v804 = vunpack.c.0.s8 %v803
  %v805 = vperm.slane %v801, %v804
  %v806 = vsel %vm149, %v739, %v728
  %v808 = vunpack.c.l.s4 1983009808
  %v809 = vunpack.c.0.s8 %v808
  %v810 = vperm.slane %v806, %v809
  %v811 = vrot.slane %v740, 4
  %v812 = vsel %vm149, %v811, %v738
  %v814 = vunpack.c.l.s4 1983009808
  %v815 = vunpack.c.0.s8 %v814
  %v816 = vperm.slane %v812, %v815
  %v817 = vrot.slane %v805, 4
  %v818 = vsel %vm149, %v817, %v799
  %v819 = vrot.slane %v799, 4
  %v820 = vsel %vm149, %v805, %v819
  %v822 = vunpack.c.l.s4 1934713408
  %v823 = vunpack.c.0.s8 %v822
  %v824 = vperm.slane %v818, %v823
  %v826 = vunpack.c.l.s4 1934713408
  %v827 = vunpack.c.0.s8 %v826
  %v828 = vperm.slane %v820, %v827
  %v829 = vrot.slane %v816, 4
  %v830 = vsel %vm149, %v829, %v810
  %v831 = vrot.slane %v810, 4
  %v832 = vsel %vm149, %v816, %v831
  %v834 = vunpack.c.l.s4 1934713408
  %v835 = vunpack.c.0.s8 %v834
  %v836 = vperm.slane %v830, %v835
  %v838 = vunpack.c.l.s4 1934713408
  %v839 = vunpack.c.0.s8 %v838
  %v840 = vperm.slane %v832, %v839
  %v841 = vrot.slane %v836, 4
  %v842 = vsel %vm149, %v841, %v824
  %v843 = vrot.slane %v824, 4
  %v844 = vsel %vm149, %v836, %v843
  %v845 = vrot.slane %v840, 4
  %v846 = vsel %vm149, %v845, %v828
  %v847 = vrot.slane %v828, 4
  %v848 = vsel %vm149, %v840, %v847
  %vm849 = vcmask 64512
  %v851 = vsel %vm849, %v308, 0
  %v854 = vsel %vm849, %v548, 0
  %856 = vmatpush.xpose.msra.mxu0 0.0
  %857 = vmatpush.xpose.msra.mxu0 0.0
  %858 = vmatpush.xpose.msra.mxu0 0.0
  %859 = vmatpush.xpose.msra.mxu0 0.0
  %860 = vmatpush.xpose.msra.mxu0 0.0
  %861 = vmatpush.xpose.msra.mxu0 0.0
  %862 = vmatpush.xpose.msra.mxu0 0.0
  %863 = vmatpush.xpose.msra.mxu0 0.0
  %864 = vmatpush.xpose.msra.mxu0 0.0
  %865 = vmatpush.xpose.msra.mxu0 0.0
  %866 = vmatpush.xpose.msra.mxu0 0.0
  %867 = vmatpush.xpose.msra.mxu0 0.0
  %868 = vmatpush.xpose.msra.mxu0 0.0
  %869 = vmatpush.xpose.msra.mxu0 0.0
  %870 = vmatpush.xpose.msra.mxu0 0.0
  %871 = vmatpush.xpose.msra.mxu0 %v854
  %872 = vmatmul.f32.gmra.mxu0 %v851
  %v873 = vpop.f32.mrf.mxu0
  %v874 = vadd.f32 0.0, %v873
  %875 = vdwg.mxu0
  %v877 = vsel %vm849, %v310, 0
  %v880 = vsel %vm849, %v550, 0
  %882 = vmatpush.xpose.msra.mxu0 0.0
  %883 = vmatpush.xpose.msra.mxu0 0.0
  %884 = vmatpush.xpose.msra.mxu0 0.0
  %885 = vmatpush.xpose.msra.mxu0 0.0
  %886 = vmatpush.xpose.msra.mxu0 0.0
  %887 = vmatpush.xpose.msra.mxu0 0.0
  %888 = vmatpush.xpose.msra.mxu0 0.0
  %889 = vmatpush.xpose.msra.mxu0 0.0
  %890 = vmatpush.xpose.msra.mxu0 0.0
  %891 = vmatpush.xpose.msra.mxu0 0.0
  %892 = vmatpush.xpose.msra.mxu0 0.0
  %893 = vmatpush.xpose.msra.mxu0 0.0
  %894 = vmatpush.xpose.msra.mxu0 0.0
  %895 = vmatpush.xpose.msra.mxu0 0.0
  %896 = vmatpush.xpose.msra.mxu0 0.0
  %897 = vmatpush.xpose.msra.mxu0 %v880
  %898 = vmatmul.f32.gmra.mxu0 %v877
  %v899 = vpop.f32.mrf.mxu0
  %v900 = vadd.f32 0.0, %v899
  %901 = vdwg.mxu0
  %v903 = vsel %vm849, %v312, 0
  %v906 = vsel %vm849, %v552, 0
  %908 = vmatpush.xpose.msra.mxu0 0.0
  %909 = vmatpush.xpose.msra.mxu0 0.0
  %910 = vmatpush.xpose.msra.mxu0 0.0
  %911 = vmatpush.xpose.msra.mxu0 0.0
  %912 = vmatpush.xpose.msra.mxu0 0.0
  %913 = vmatpush.xpose.msra.mxu0 0.0
  %914 = vmatpush.xpose.msra.mxu0 0.0
  %915 = vmatpush.xpose.msra.mxu0 0.0
  %916 = vmatpush.xpose.msra.mxu0 0.0
  %917 = vmatpush.xpose.msra.mxu0 0.0
  %918 = vmatpush.xpose.msra.mxu0 0.0
  %919 = vmatpush.xpose.msra.mxu0 0.0
  %920 = vmatpush.xpose.msra.mxu0 0.0
  %921 = vmatpush.xpose.msra.mxu0 0.0
  %922 = vmatpush.xpose.msra.mxu0 0.0
  %923 = vmatpush.xpose.msra.mxu0 %v906
  %924 = vmatmul.f32.gmra.mxu0 %v903
  %v925 = vpop.f32.mrf.mxu0
  %v926 = vadd.f32 0.0, %v925
  %927 = vdwg.mxu0
  %v929 = vsel %vm849, %v314, 0
  %v932 = vsel %vm849, %v554, 0
  %934 = vmatpush.xpose.msra.mxu0 0.0
  %935 = vmatpush.xpose.msra.mxu0 0.0
  %936 = vmatpush.xpose.msra.mxu0 0.0
  %937 = vmatpush.xpose.msra.mxu0 0.0
  %938 = vmatpush.xpose.msra.mxu0 0.0
  %939 = vmatpush.xpose.msra.mxu0 0.0
  %940 = vmatpush.xpose.msra.mxu0 0.0
  %941 = vmatpush.xpose.msra.mxu0 0.0
  %942 = vmatpush.xpose.msra.mxu0 0.0
  %943 = vmatpush.xpose.msra.mxu0 0.0
  %944 = vmatpush.xpose.msra.mxu0 0.0
  %945 = vmatpush.xpose.msra.mxu0 0.0
  %946 = vmatpush.xpose.msra.mxu0 0.0
  %947 = vmatpush.xpose.msra.mxu0 0.0
  %948 = vmatpush.xpose.msra.mxu0 0.0
  %949 = vmatpush.xpose.msra.mxu0 %v932
  %950 = vmatmul.f32.gmra.mxu0 %v929
  %v951 = vpop.f32.mrf.mxu0
  %v952 = vadd.f32 0.0, %v951
  %953 = vdwg.mxu0
  %v955 = vsel %vm849, %v362, 0
  %v958 = vsel %vm849, %v602, 0
  %960 = vmatpush.xpose.msra.mxu0 0.0
  %961 = vmatpush.xpose.msra.mxu0 0.0
  %962 = vmatpush.xpose.msra.mxu0 0.0
  %963 = vmatpush.xpose.msra.mxu0 0.0
  %964 = vmatpush.xpose.msra.mxu0 0.0
  %965 = vmatpush.xpose.msra.mxu0 0.0
  %966 = vmatpush.xpose.msra.mxu0 0.0
  %967 = vmatpush.xpose.msra.mxu0 0.0
  %968 = vmatpush.xpose.msra.mxu0 0.0
  %969 = vmatpush.xpose.msra.mxu0 0.0
  %970 = vmatpush.xpose.msra.mxu0 0.0
  %971 = vmatpush.xpose.msra.mxu0 0.0
  %972 = vmatpush.xpose.msra.mxu0 0.0
  %973 = vmatpush.xpose.msra.mxu0 0.0
  %974 = vmatpush.xpose.msra.mxu0 0.0
  %975 = vmatpush.xpose.msra.mxu0 %v958
  %976 = vmatmul.f32.gmra.mxu0 %v955
  %v977 = vpop.f32.mrf.mxu0
  %v978 = vadd.f32 0.0, %v977
  %979 = vdwg.mxu0
  %v981 = vsel %vm849, %v364, 0
  %v984 = vsel %vm849, %v604, 0
  %986 = vmatpush.xpose.msra.mxu0 0.0
  %987 = vmatpush.xpose.msra.mxu0 0.0
  %988 = vmatpush.xpose.msra.mxu0 0.0
  %989 = vmatpush.xpose.msra.mxu0 0.0
  %990 = vmatpush.xpose.msra.mxu0 0.0
  %991 = vmatpush.xpose.msra.mxu0 0.0
  %992 = vmatpush.xpose.msra.mxu0 0.0
  %993 = vmatpush.xpose.msra.mxu0 0.0
  %994 = vmatpush.xpose.msra.mxu0 0.0
  %995 = vmatpush.xpose.msra.mxu0 0.0
  %996 = vmatpush.xpose.msra.mxu0 0.0
  %997 = vmatpush.xpose.msra.mxu0 0.0
  %998 = vmatpush.xpose.msra.mxu0 0.0
  %999 = vmatpush.xpose.msra.mxu0 0.0
  %1000 = vmatpush.xpose.msra.mxu0 0.0
  %1001 = vmatpush.xpose.msra.mxu0 %v984
  %1002 = vmatmul.f32.gmra.mxu0 %v981
  %v1003 = vpop.f32.mrf.mxu0
  %v1004 = vadd.f32 0.0, %v1003
  %1005 = vdwg.mxu0
  %v1007 = vsel %vm849, %v366, 0
  %v1010 = vsel %vm849, %v606, 0
  %1012 = vmatpush.xpose.msra.mxu0 0.0
  %1013 = vmatpush.xpose.msra.mxu0 0.0
  %1014 = vmatpush.xpose.msra.mxu0 0.0
  %1015 = vmatpush.xpose.msra.mxu0 0.0
  %1016 = vmatpush.xpose.msra.mxu0 0.0
  %1017 = vmatpush.xpose.msra.mxu0 0.0
  %1018 = vmatpush.xpose.msra.mxu0 0.0
  %1019 = vmatpush.xpose.msra.mxu0 0.0
  %1020 = vmatpush.xpose.msra.mxu0 0.0
  %1021 = vmatpush.xpose.msra.mxu0 0.0
  %1022 = vmatpush.xpose.msra.mxu0 0.0
  %1023 = vmatpush.xpose.msra.mxu0 0.0
  %1024 = vmatpush.xpose.msra.mxu0 0.0
  %1025 = vmatpush.xpose.msra.mxu0 0.0
  %1026 = vmatpush.xpose.msra.mxu0 0.0
  %1027 = vmatpush.xpose.msra.mxu0 %v1010
  %1028 = vmatmul.f32.gmra.mxu0 %v1007
  %v1029 = vpop.f32.mrf.mxu0
  %v1030 = vadd.f32 0.0, %v1029
  %1031 = vdwg.mxu0
  %v1033 = vsel %vm849, %v368, 0
  %v1036 = vsel %vm849, %v608, 0
  %1038 = vmatpush.xpose.msra.mxu0 0.0
  %1039 = vmatpush.xpose.msra.mxu0 0.0
  %1040 = vmatpush.xpose.msra.mxu0 0.0
  %1041 = vmatpush.xpose.msra.mxu0 0.0
  %1042 = vmatpush.xpose.msra.mxu0 0.0
  %1043 = vmatpush.xpose.msra.mxu0 0.0
  %1044 = vmatpush.xpose.msra.mxu0 0.0
  %1045 = vmatpush.xpose.msra.mxu0 0.0
  %1046 = vmatpush.xpose.msra.mxu0 0.0
  %1047 = vmatpush.xpose.msra.mxu0 0.0
  %1048 = vmatpush.xpose.msra.mxu0 0.0
  %1049 = vmatpush.xpose.msra.mxu0 0.0
  %1050 = vmatpush.xpose.msra.mxu0 0.0
  %1051 = vmatpush.xpose.msra.mxu0 0.0
  %1052 = vmatpush.xpose.msra.mxu0 0.0
  %1053 = vmatpush.xpose.msra.mxu0 %v1036
  %1054 = vmatmul.f32.gmra.mxu0 %v1033
  %v1055 = vpop.f32.mrf.mxu0
  %v1056 = vadd.f32 0.0, %v1055
  %1057 = vdwg.mxu0
  %v1058 = vsel %vm849, %v874, -inf
  %1059 = vmax.xlane.f32.xlu0 %v1058
  %v1060 = vpop.xlane.xlu0 %1059
  %v1061 = vsel %vm849, %v900, -inf
  %1062 = vmax.xlane.f32.xlu0 %v1061
  %v1063 = vpop.xlane.xlu0 %1062
  %v1064 = vsel %vm849, %v926, -inf
  %1065 = vmax.xlane.f32.xlu0 %v1064
  %v1066 = vpop.xlane.xlu0 %1065
  %v1067 = vsel %vm849, %v952, -inf
  %1068 = vmax.xlane.f32.xlu0 %v1067
  %v1069 = vpop.xlane.xlu0 %1068
  %v1070 = vsel %vm849, %v978, -inf
  %1071 = vmax.xlane.f32.xlu0 %v1070
  %v1072 = vpop.xlane.xlu0 %1071
  %v1073 = vsel %vm849, %v1004, -inf
  %1074 = vmax.xlane.f32.xlu0 %v1073
  %v1075 = vpop.xlane.xlu0 %1074
  %v1076 = vsel %vm849, %v1030, -inf
  %1077 = vmax.xlane.f32.xlu0 %v1076
  %v1078 = vpop.xlane.xlu0 %1077
  %v1079 = vsel %vm849, %v1056, -inf
  %1080 = vmax.xlane.f32.xlu0 %v1079
  %v1081 = vpop.xlane.xlu0 %1080
  %v1082 = vsub.f32 %v874, %v1060
  %v1083 = vsub.f32 %v900, %v1063
  %v1084 = vsub.f32 %v926, %v1066
  %v1085 = vsub.f32 %v952, %v1069
  %v1086 = vsub.f32 %v978, %v1072
  %v1087 = vsub.f32 %v1004, %v1075
  %v1088 = vsub.f32 %v1030, %v1078
  %v1089 = vsub.f32 %v1056, %v1081
  %v1090 = vmul.f32 %v1082, 1.442695
  %v1091 = vpow.pop %v1090
  %v1092 = vmul.f32 %v1083, 1.442695
  %v1093 = vpow.pop %v1092
  %v1094 = vmul.f32 %v1084, 1.442695
  %v1095 = vpow.pop %v1094
  %v1096 = vmul.f32 %v1085, 1.442695
  %v1097 = vpow.pop %v1096
  %v1098 = vmul.f32 %v1086, 1.442695
  %v1099 = vpow.pop %v1098
  %v1100 = vmul.f32 %v1087, 1.442695
  %v1101 = vpow.pop %v1100
  %v1102 = vmul.f32 %v1088, 1.442695
  %v1103 = vpow.pop %v1102
  %v1104 = vmul.f32 %v1089, 1.442695
  %v1105 = vpow.pop %v1104
  %v1106 = vsel %vm849, %v1091, 0.0
  %1107 = vadd.xlane.f32.xlu0 %v1106
  %v1108 = vpop.xlane.xlu0 %1107
  %v1109 = vsel %vm849, %v1093, 0.0
  %1110 = vadd.xlane.f32.xlu0 %v1109
  %v1111 = vpop.xlane.xlu0 %1110
  %v1112 = vsel %vm849, %v1095, 0.0
  %1113 = vadd.xlane.f32.xlu0 %v1112
  %v1114 = vpop.xlane.xlu0 %1113
  %v1115 = vsel %vm849, %v1097, 0.0
  %1116 = vadd.xlane.f32.xlu0 %v1115
  %v1117 = vpop.xlane.xlu0 %1116
  %v1118 = vsel %vm849, %v1099, 0.0
  %1119 = vadd.xlane.f32.xlu0 %v1118
  %v1120 = vpop.xlane.xlu0 %1119
  %v1121 = vsel %vm849, %v1101, 0.0
  %1122 = vadd.xlane.f32.xlu0 %v1121
  %v1123 = vpop.xlane.xlu0 %1122
  %v1124 = vsel %vm849, %v1103, 0.0
  %1125 = vadd.xlane.f32.xlu0 %v1124
  %v1126 = vpop.xlane.xlu0 %1125
  %v1127 = vsel %vm849, %v1105, 0.0
  %1128 = vadd.xlane.f32.xlu0 %v1127
  %v1129 = vpop.xlane.xlu0 %1128
  %v1130 = vrcp.pop %v1108
  %v1131 = vrcp.pop %v1111
  %v1132 = vrcp.pop %v1114
  %v1133 = vrcp.pop %v1117
  %v1134 = vrcp.pop %v1120
  %v1135 = vrcp.pop %v1123
  %v1136 = vrcp.pop %v1126
  %v1137 = vrcp.pop %v1129
  %v1138 = vmul.f32 %v1091, %v1130
  %v1139 = vmul.f32 %v1093, %v1131
  %v1140 = vmul.f32 %v1095, %v1132
  %v1141 = vmul.f32 %v1097, %v1133
  %v1142 = vmul.f32 %v1099, %v1134
  %v1143 = vmul.f32 %v1101, %v1135
  %v1144 = vmul.f32 %v1103, %v1136
  %v1145 = vmul.f32 %v1105, %v1137
  %v1147 = vsel %vm849, %v1138, 0
  %1149 = vmatpush.msra.mxu0 0.0
  %1150 = vmatpush.msra.mxu0 0.0
  %1151 = vmatpush.msra.mxu0 0.0
  %1152 = vmatpush.msra.mxu0 0.0
  %1153 = vmatpush.msra.mxu0 0.0
  %1154 = vmatpush.msra.mxu0 0.0
  %1155 = vmatpush.msra.mxu0 0.0
  %1156 = vmatpush.msra.mxu0 0.0
  %1157 = vmatpush.msra.mxu0 0.0
  %1158 = vmatpush.msra.mxu0 0.0
  %1159 = vmatpush.msra.mxu0 0.0
  %1160 = vmatpush.msra.mxu0 0.0
  %1161 = vmatpush.msra.mxu0 0.0
  %1162 = vmatpush.msra.mxu0 0.0
  %1163 = vmatpush.msra.mxu0 0.0
  %1164 = vmatpush.msra.mxu0 %v788
  %1165 = vmatmul.f32.gmra.mxu0 %v1147
  %v1166 = vpop.f32.mrf.mxu0
  %v1167 = vadd.f32 0.0, %v1166
  %1168 = vdwg.mxu0
  %v1170 = vsel %vm849, %v1139, 0
  %1172 = vmatpush.msra.mxu0 0.0
  %1173 = vmatpush.msra.mxu0 0.0
  %1174 = vmatpush.msra.mxu0 0.0
  %1175 = vmatpush.msra.mxu0 0.0
  %1176 = vmatpush.msra.mxu0 0.0
  %1177 = vmatpush.msra.mxu0 0.0
  %1178 = vmatpush.msra.mxu0 0.0
  %1179 = vmatpush.msra.mxu0 0.0
  %1180 = vmatpush.msra.mxu0 0.0
  %1181 = vmatpush.msra.mxu0 0.0
  %1182 = vmatpush.msra.mxu0 0.0
  %1183 = vmatpush.msra.mxu0 0.0
  %1184 = vmatpush.msra.mxu0 0.0
  %1185 = vmatpush.msra.mxu0 0.0
  %1186 = vmatpush.msra.mxu0 0.0
  %1187 = vmatpush.msra.mxu0 %v790
  %1188 = vmatmul.f32.gmra.mxu0 %v1170
  %v1189 = vpop.f32.mrf.mxu0
  %v1190 = vadd.f32 0.0, %v1189
  %1191 = vdwg.mxu0
  %v1193 = vsel %vm849, %v1140, 0
  %1195 = vmatpush.msra.mxu0 0.0
  %1196 = vmatpush.msra.mxu0 0.0
  %1197 = vmatpush.msra.mxu0 0.0
  %1198 = vmatpush.msra.mxu0 0.0
  %1199 = vmatpush.msra.mxu0 0.0
  %1200 = vmatpush.msra.mxu0 0.0
  %1201 = vmatpush.msra.mxu0 0.0
  %1202 = vmatpush.msra.mxu0 0.0
  %1203 = vmatpush.msra.mxu0 0.0
  %1204 = vmatpush.msra.mxu0 0.0
  %1205 = vmatpush.msra.mxu0 0.0
  %1206 = vmatpush.msra.mxu0 0.0
  %1207 = vmatpush.msra.mxu0 0.0
  %1208 = vmatpush.msra.mxu0 0.0
  %1209 = vmatpush.msra.mxu0 0.0
  %1210 = vmatpush.msra.mxu0 %v792
  %1211 = vmatmul.f32.gmra.mxu0 %v1193
  %v1212 = vpop.f32.mrf.mxu0
  %v1213 = vadd.f32 0.0, %v1212
  %1214 = vdwg.mxu0
  %v1216 = vsel %vm849, %v1141, 0
  %1218 = vmatpush.msra.mxu0 0.0
  %1219 = vmatpush.msra.mxu0 0.0
  %1220 = vmatpush.msra.mxu0 0.0
  %1221 = vmatpush.msra.mxu0 0.0
  %1222 = vmatpush.msra.mxu0 0.0
  %1223 = vmatpush.msra.mxu0 0.0
  %1224 = vmatpush.msra.mxu0 0.0
  %1225 = vmatpush.msra.mxu0 0.0
  %1226 = vmatpush.msra.mxu0 0.0
  %1227 = vmatpush.msra.mxu0 0.0
  %1228 = vmatpush.msra.mxu0 0.0
  %1229 = vmatpush.msra.mxu0 0.0
  %1230 = vmatpush.msra.mxu0 0.0
  %1231 = vmatpush.msra.mxu0 0.0
  %1232 = vmatpush.msra.mxu0 0.0
  %1233 = vmatpush.msra.mxu0 %v794
  %1234 = vmatmul.f32.gmra.mxu0 %v1216
  %v1235 = vpop.f32.mrf.mxu0
  %v1236 = vadd.f32 0.0, %v1235
  %1237 = vdwg.mxu0
  %v1239 = vsel %vm849, %v1142, 0
  %1241 = vmatpush.msra.mxu0 0.0
  %1242 = vmatpush.msra.mxu0 0.0
  %1243 = vmatpush.msra.mxu0 0.0
  %1244 = vmatpush.msra.mxu0 0.0
  %1245 = vmatpush.msra.mxu0 0.0
  %1246 = vmatpush.msra.mxu0 0.0
  %1247 = vmatpush.msra.mxu0 0.0
  %1248 = vmatpush.msra.mxu0 0.0
  %1249 = vmatpush.msra.mxu0 0.0
  %1250 = vmatpush.msra.mxu0 0.0
  %1251 = vmatpush.msra.mxu0 0.0
  %1252 = vmatpush.msra.mxu0 0.0
  %1253 = vmatpush.msra.mxu0 0.0
  %1254 = vmatpush.msra.mxu0 0.0
  %1255 = vmatpush.msra.mxu0 0.0
  %1256 = vmatpush.msra.mxu0 %v842
  %1257 = vmatmul.f32.gmra.mxu0 %v1239
  %v1258 = vpop.f32.mrf.mxu0
  %v1259 = vadd.f32 0.0, %v1258
  %1260 = vdwg.mxu0
  %v1262 = vsel %vm849, %v1143, 0
  %1264 = vmatpush.msra.mxu0 0.0
  %1265 = vmatpush.msra.mxu0 0.0
  %1266 = vmatpush.msra.mxu0 0.0
  %1267 = vmatpush.msra.mxu0 0.0
  %1268 = vmatpush.msra.mxu0 0.0
  %1269 = vmatpush.msra.mxu0 0.0
  %1270 = vmatpush.msra.mxu0 0.0
  %1271 = vmatpush.msra.mxu0 0.0
  %1272 = vmatpush.msra.mxu0 0.0
  %1273 = vmatpush.msra.mxu0 0.0
  %1274 = vmatpush.msra.mxu0 0.0
  %1275 = vmatpush.msra.mxu0 0.0
  %1276 = vmatpush.msra.mxu0 0.0
  %1277 = vmatpush.msra.mxu0 0.0
  %1278 = vmatpush.msra.mxu0 0.0
  %1279 = vmatpush.msra.mxu0 %v844
  %1280 = vmatmul.f32.gmra.mxu0 %v1262
  %v1281 = vpop.f32.mrf.mxu0
  %v1282 = vadd.f32 0.0, %v1281
  %1283 = vdwg.mxu0
  %v1285 = vsel %vm849, %v1144, 0
  %1287 = vmatpush.msra.mxu0 0.0
  %1288 = vmatpush.msra.mxu0 0.0
  %1289 = vmatpush.msra.mxu0 0.0
  %1290 = vmatpush.msra.mxu0 0.0
  %1291 = vmatpush.msra.mxu0 0.0
  %1292 = vmatpush.msra.mxu0 0.0
  %1293 = vmatpush.msra.mxu0 0.0
  %1294 = vmatpush.msra.mxu0 0.0
  %1295 = vmatpush.msra.mxu0 0.0
  %1296 = vmatpush.msra.mxu0 0.0
  %1297 = vmatpush.msra.mxu0 0.0
  %1298 = vmatpush.msra.mxu0 0.0
  %1299 = vmatpush.msra.mxu0 0.0
  %1300 = vmatpush.msra.mxu0 0.0
  %1301 = vmatpush.msra.mxu0 0.0
  %1302 = vmatpush.msra.mxu0 %v846
  %1303 = vmatmul.f32.gmra.mxu0 %v1285
  %v1304 = vpop.f32.mrf.mxu0
  %v1305 = vadd.f32 0.0, %v1304
  %1306 = vdwg.mxu0
  %v1308 = vsel %vm849, %v1145, 0
  %1310 = vmatpush.msra.mxu0 0.0
  %1311 = vmatpush.msra.mxu0 0.0
  %1312 = vmatpush.msra.mxu0 0.0
  %1313 = vmatpush.msra.mxu0 0.0
  %1314 = vmatpush.msra.mxu0 0.0
  %1315 = vmatpush.msra.mxu0 0.0
  %1316 = vmatpush.msra.mxu0 0.0
  %1317 = vmatpush.msra.mxu0 0.0
  %1318 = vmatpush.msra.mxu0 0.0
  %1319 = vmatpush.msra.mxu0 0.0
  %1320 = vmatpush.msra.mxu0 0.0
  %1321 = vmatpush.msra.mxu0 0.0
  %1322 = vmatpush.msra.mxu0 0.0
  %1323 = vmatpush.msra.mxu0 0.0
  %1324 = vmatpush.msra.mxu0 0.0
  %1325 = vmatpush.msra.mxu0 %v848
  %1326 = vmatmul.f32.gmra.mxu0 %v1308
  %v1327 = vpop.f32.mrf.mxu0
  %v1328 = vadd.f32 0.0, %v1327
  %1329 = vdwg.mxu0
  %v1330 = vrot.slane %v1213, 4
  %v1331 = vsel %vm149, %v1330, %v1167
  %v1332 = vrot.slane %v1167, 4
  %v1333 = vsel %vm149, %v1213, %v1332
  %v1335 = vunpack.c.l.s4 1983009808
  %v1336 = vunpack.c.0.s8 %v1335
  %v1337 = vperm.slane %v1331, %v1336
  %v1339 = vunpack.c.l.s4 1983009808
  %v1340 = vunpack.c.0.s8 %v1339
  %v1341 = vperm.slane %v1333, %v1340
  %v1342 = vrot.slane %v1236, 4
  %v1343 = vsel %vm149, %v1342, %v1190
  %v1344 = vrot.slane %v1190, 4
  %v1345 = vsel %vm149, %v1236, %v1344
  %v1347 = vunpack.c.l.s4 1983009808
  %v1348 = vunpack.c.0.s8 %v1347
  %v1349 = vperm.slane %v1343, %v1348
  %v1351 = vunpack.c.l.s4 1983009808
  %v1352 = vunpack.c.0.s8 %v1351
  %v1353 = vperm.slane %v1345, %v1352
  %v1354 = vrot.slane %v1349, 4
  %v1355 = vsel %vm149, %v1354, %v1337
  %v1356 = vrot.slane %v1337, 4
  %v1357 = vsel %vm149, %v1349, %v1356
  %v1359 = vunpack.c.l.s4 1934713408
  %v1360 = vunpack.c.0.s8 %v1359
  %v1361 = vperm.slane %v1355, %v1360
  %v1363 = vunpack.c.l.s4 1934713408
  %v1364 = vunpack.c.0.s8 %v1363
  %v1365 = vperm.slane %v1357, %v1364
  %v1366 = vrot.slane %v1353, 4
  %v1367 = vsel %vm149, %v1366, %v1341
  %v1368 = vrot.slane %v1341, 4
  %v1369 = vsel %vm149, %v1353, %v1368
  %v1371 = vunpack.c.l.s4 1934713408
  %v1372 = vunpack.c.0.s8 %v1371
  %v1373 = vperm.slane %v1367, %v1372
  %v1375 = vunpack.c.l.s4 1934713408
  %v1376 = vunpack.c.0.s8 %v1375
  %v1377 = vperm.slane %v1369, %v1376
  %v1378 = vrot.slane %v1361, 4
  %v1379 = vsel %vm149, 0.0, %v1378
  %v1380 = vrot.slane %v1365, 4
  %v1381 = vsel %vm149, 0.0, %v1380
  %v1382 = vrot.slane %v1373, 4
  %v1383 = vsel %vm149, 0.0, %v1382
  %v1384 = vrot.slane %v1377, 4
  %v1385 = vsel %vm149, 0.0, %v1384
  %v1386 = vrot.slane %v1305, 4
  %v1387 = vsel %vm149, %v1386, %v1259
  %v1388 = vrot.slane %v1259, 4
  %v1389 = vsel %vm149, %v1305, %v1388
  %v1391 = vunpack.c.l.s4 1983009808
  %v1392 = vunpack.c.0.s8 %v1391
  %v1393 = vperm.slane %v1387, %v1392
  %v1395 = vunpack.c.l.s4 1983009808
  %v1396 = vunpack.c.0.s8 %v1395
  %v1397 = vperm.slane %v1389, %v1396
  %v1398 = vrot.slane %v1328, 4
  %v1399 = vsel %vm149, %v1398, %v1282
  %v1400 = vrot.slane %v1282, 4
  %v1401 = vsel %vm149, %v1328, %v1400
  %v1403 = vunpack.c.l.s4 1983009808
  %v1404 = vunpack.c.0.s8 %v1403
  %v1405 = vperm.slane %v1399, %v1404
  %v1407 = vunpack.c.l.s4 1983009808
  %v1408 = vunpack.c.0.s8 %v1407
  %v1409 = vperm.slane %v1401, %v1408
  %v1410 = vrot.slane %v1405, 4
  %v1411 = vsel %vm149, %v1410, %v1393
  %v1412 = vrot.slane %v1393, 4
  %v1413 = vsel %vm149, %v1405, %v1412
  %v1415 = vunpack.c.l.s4 1934713408
  %v1416 = vunpack.c.0.s8 %v1415
  %v1417 = vperm.slane %v1411, %v1416
  %v1419 = vunpack.c.l.s4 1934713408
  %v1420 = vunpack.c.0.s8 %v1419
  %v1421 = vperm.slane %v1413, %v1420
  %v1422 = vrot.slane %v1409, 4
  %v1423 = vsel %vm149, %v1422, %v1397
  %v1424 = vrot.slane %v1397, 4
  %v1425 = vsel %vm149, %v1409, %v1424
  %v1427 = vunpack.c.l.s4 1934713408
  %v1428 = vunpack.c.0.s8 %v1427
  %v1429 = vperm.slane %v1423, %v1428
  %v1431 = vunpack.c.l.s4 1934713408
  %v1432 = vunpack.c.0.s8 %v1431
  %v1433 = vperm.slane %v1425, %v1432
  %v1434 = vrot.slane %v1417, 4
  %v1435 = vsel %vm149, 0.0, %v1434
  %v1436 = vrot.slane %v1421, 4
  %v1437 = vsel %vm149, 0.0, %v1436
  %v1438 = vrot.slane %v1429, 4
  %v1439 = vsel %vm149, 0.0, %v1438
  %v1440 = vrot.slane %v1433, 4
  %v1441 = vsel %vm149, 0.0, %v1440
  %v1442 = vsel %vm149, %v1380, %v1361
  %v1444 = vunpack.c.l.s4 1983009808
  %v1445 = vunpack.c.0.s8 %v1444
  %v1446 = vperm.slane %v1442, %v1445
  %v1447 = vrot.slane %v1381, 4
  %v1448 = vsel %vm149, %v1447, %v1379
  %v1450 = vunpack.c.l.s4 1983009808
  %v1451 = vunpack.c.0.s8 %v1450
  %v1452 = vperm.slane %v1448, %v1451
  %v1453 = vsel %vm149, %v1384, %v1373
  %v1455 = vunpack.c.l.s4 1983009808
  %v1456 = vunpack.c.0.s8 %v1455
  %v1457 = vperm.slane %v1453, %v1456
  %v1458 = vrot.slane %v1385, 4
  %v1459 = vsel %vm149, %v1458, %v1383
  %v1461 = vunpack.c.l.s4 1983009808
  %v1462 = vunpack.c.0.s8 %v1461
  %v1463 = vperm.slane %v1459, %v1462
  %v1464 = vrot.slane %v1452, 4
  %v1465 = vsel %vm149, %v1464, %v1446
  %v1466 = vrot.slane %v1446, 4
  %v1467 = vsel %vm149, %v1452, %v1466
  %v1469 = vunpack.c.l.s4 1934713408
  %v1470 = vunpack.c.0.s8 %v1469
  %v1471 = vperm.slane %v1465, %v1470
  %v1473 = vunpack.c.l.s4 1934713408
  %v1474 = vunpack.c.0.s8 %v1473
  %v1475 = vperm.slane %v1467, %v1474
  %v1476 = vrot.slane %v1463, 4
  %v1477 = vsel %vm149, %v1476, %v1457
  %v1478 = vrot.slane %v1457, 4
  %v1479 = vsel %vm149, %v1463, %v1478
  %v1481 = vunpack.c.l.s4 1934713408
  %v1482 = vunpack.c.0.s8 %v1481
  %v1483 = vperm.slane %v1477, %v1482
  %v1485 = vunpack.c.l.s4 1934713408
  %v1486 = vunpack.c.0.s8 %v1485
  %v1487 = vperm.slane %v1479, %v1486
  %v1488 = vrot.slane %v1483, 4
  %v1489 = vsel %vm149, %v1488, %v1471
  %v1490 = vrot.slane %v1471, 4
  %v1491 = vsel %vm149, %v1483, %v1490
  %v1492 = vrot.slane %v1487, 4
  %v1493 = vsel %vm149, %v1492, %v1475
  %v1494 = vrot.slane %v1475, 4
  %v1495 = vsel %vm149, %v1487, %v1494
  %v1496 = vsel %vm149, %v1436, %v1417
  %v1498 = vunpack.c.l.s4 1983009808
  %v1499 = vunpack.c.0.s8 %v1498
  %v1500 = vperm.slane %v1496, %v1499
  %v1501 = vrot.slane %v1437, 4
  %v1502 = vsel %vm149, %v1501, %v1435
  %v1504 = vunpack.c.l.s4 1983009808
  %v1505 = vunpack.c.0.s8 %v1504
  %v1506 = vperm.slane %v1502, %v1505
  %v1507 = vsel %vm149, %v1440, %v1429
  %v1509 = vunpack.c.l.s4 1983009808
  %v1510 = vunpack.c.0.s8 %v1509
  %v1511 = vperm.slane %v1507, %v1510
  %v1512 = vrot.slane %v1441, 4
  %v1513 = vsel %vm149, %v1512, %v1439
  %v1515 = vunpack.c.l.s4 1983009808
  %v1516 = vunpack.c.0.s8 %v1515
  %v1517 = vperm.slane %v1513, %v1516
  %v1518 = vrot.slane %v1506, 4
  %v1519 = vsel %vm149, %v1518, %v1500
  %v1520 = vrot.slane %v1500, 4
  %v1521 = vsel %vm149, %v1506, %v1520
  %v1523 = vunpack.c.l.s4 1934713408
  %v1524 = vunpack.c.0.s8 %v1523
  %v1525 = vperm.slane %v1519, %v1524
  %v1527 = vunpack.c.l.s4 1934713408
  %v1528 = vunpack.c.0.s8 %v1527
  %v1529 = vperm.slane %v1521, %v1528
  %v1530 = vrot.slane %v1517, 4
  %v1531 = vsel %vm149, %v1530, %v1511
  %v1532 = vrot.slane %v1511, 4
  %v1533 = vsel %vm149, %v1517, %v1532
  %v1535 = vunpack.c.l.s4 1934713408
  %v1536 = vunpack.c.0.s8 %v1535
  %v1537 = vperm.slane %v1531, %v1536
  %v1539 = vunpack.c.l.s4 1934713408
  %v1540 = vunpack.c.0.s8 %v1539
  %v1541 = vperm.slane %v1533, %v1540
  %v1542 = vrot.slane %v1537, 4
  %v1543 = vsel %vm149, %v1542, %v1525
  %v1544 = vrot.slane %v1525, 4
  %v1545 = vsel %vm149, %v1537, %v1544
  %v1546 = vrot.slane %v1541, 4
  %v1547 = vsel %vm149, %v1546, %v1529
  %v1548 = vrot.slane %v1529, 4
  %v1549 = vsel %vm149, %v1541, %v1548
  %1552 = vrot.lane.b32.xlu0 %v1491, 8
  %v1553 = vpop.permute.xlu0 %1552
  %1554 = vrot.lane.b32.xlu0 %v1545, 8
  %v1555 = vpop.permute.xlu0 %1554
  %1560 = vrot.lane.b32.xlu0 %v1493, 16
  %v1561 = vpop.permute.xlu0 %1560
  %1562 = vrot.lane.b32.xlu0 %v1547, 16
  %v1563 = vpop.permute.xlu0 %1562
  %1568 = vrot.lane.b32.xlu0 %v1495, 24
  %v1569 = vpop.permute.xlu0 %1568
  %1570 = vrot.lane.b32.xlu0 %v1549, 24
  %v1571 = vpop.permute.xlu0 %1570
  %v1574 = vsel %vm849, %v1489, %v1553
  %v1575 = vsel %vm849, %v1543, %v1555
  %vm1576 = vcmask 130048
  %v1577 = vsel %vm1576, %v1574, %v1561
  %v1578 = vsel %vm1576, %v1575, %v1563
  %vm1579 = vcmask 195584
  %v1580 = vsel %vm1579, %v1577, %v1569
  %v1581 = vsel %vm1579, %v1578, %v1571
  %v1582 = vld [vmem:[%s2] sm:$0xff]
  %v1583 = vld [vmem:[%s2 + $0x8] sm:$0xff]
  %v1584 = vld [vmem:[%s2 + $0x10] sm:$0xff]
  %v1585 = vld [vmem:[%s2 + $0x18] sm:$0xff]
  %v1586 = vld [vmem:[%s2 + $0x20] sm:$0x1]
  %v1587 = vperm.slane %v1586, 0
  %v1589 = vsel %vm26, %v1580, 0
  %v1592 = vsel %vm26, %v1581, 0
  %1594 = vmatpush.msra.mxu0 0.0
  %1595 = vmatpush.msra.mxu0 0.0
  %1596 = vmatpush.msra.mxu0 0.0
  %1597 = vmatpush.msra.mxu0 0.0
  %1598 = vmatpush.msra.mxu0 0.0
  %1599 = vmatpush.msra.mxu0 0.0
  %1600 = vmatpush.msra.mxu0 0.0
  %1601 = vmatpush.msra.mxu0 0.0
  %1602 = vmatpush.msra.mxu0 0.0
  %1603 = vmatpush.msra.mxu0 0.0
  %1604 = vmatpush.msra.mxu0 0.0
  %1605 = vmatpush.msra.mxu0 0.0
  %1606 = vmatpush.msra.mxu0 %v1585
  %1607 = vmatpush.msra.mxu0 %v1584
  %1608 = vmatpush.msra.mxu0 %v1583
  %1609 = vmatpush.msra.mxu0 %v1582
  %1610 = vmatmul.f32.gmra.mxu0 %v1589
  %v1611 = vpop.f32.mrf.mxu0
  %v1612 = vadd.f32 %v1587, %v1611
  %1613 = vmatmul.f32.gmra.mxu0 %v1592
  %v1614 = vpop.f32.mrf.mxu0
  %v1615 = vadd.f32 %v1587, %v1614
  %1616 = vdwg.mxu0
  %1617 = vst [vmem:[%s3] sm:$0xff] %v1612
  %1618 = vst [vmem:[%s3 + $0x8] sm:$0xff] %v1615
  // Predicated region
  $region14: #{_mha_forward.1} parent=0 // pred_check
    _
  $region15: #{_mha_forward.1} parent=0 // pred_check_branch
    %1620 = sbr.rel (0) target = $region17
  $region16: #{_mha_forward.1} parent=0 // pred_region
    _
  $region17: #{_mha_forward.1} parent=0 // pred_fallthru
    _
  // Predicated region
  $region18: #{_mha_forward.1} parent=0 // pred_check
    _
  $region19: #{_mha_forward.1} parent=0 // pred_check_branch
    %1622 = sbr.rel (0) target = $region21
  $region20: #{_mha_forward.1} parent=0 // pred_region
    _
  $region21: #{_mha_forward.1} parent=0 // pred_fallthru
    _

</llo_original>
